<compile_context>
chip_gen: v5e
topology: v5e:2x2
jax: 0.10.0
libtpu: 0.0.40
codegen_flags: <defaults>
</compile_context>

<pallas_src>
import functools
import math

import jax
import jax.numpy as jnp
from jax.experimental import pallas as pl
from jax.experimental.pallas import tpu as pltpu

LN_EPS = 1e-5          # PyTorch nn.LayerNorm default
TB_MAX = 2048          # max batch-tile rows (sweep 2048-4096); IO double-buffers are only a few MiB
LN_SUMS_ON_MXU = True  # offload LayerNorm row reductions from the XLU to the (idle) MXU


def _ln_normalize(x):
    """(x - mean) * rsqrt(var + eps); affine folded into the next matmul by the wrapper."""
    f = x.shape[-1]
    inv_f = 1.0 / float(f)
    if LN_SUMS_ON_MXU:
        # Row sums via MXU matmul with a ones column: frees XLU/VPU slots (v6e/v7x have
        # only 2 homogeneous XLUs and these reductions are lane-sparse 64/32-of-128).
        ones = jnp.ones((f, 1), dtype=jnp.float32)
        s1 = jnp.dot(x, ones, preferred_element_type=jnp.float32)
        s2 = jnp.dot(x * x, ones, preferred_element_type=jnp.float32)
    else:
        s1 = jnp.sum(x, axis=-1, keepdims=True)
        s2 = jnp.sum(x * x, axis=-1, keepdims=True)
    mean = s1 * inv_f
    var = jnp.maximum(s2 * inv_f - mean * mean, 0.0)   # one-pass biased variance + clamp
    inv = jax.lax.rsqrt(var + LN_EPS)                  # EUP rsqrt
    return (x - mean) * inv


def _make_kernel(num_heads):
    """Kernel over one batch tile.  Ref order: obs, w1,b1,w2,b2,w3,b3, (wh_i,bh_i)*H, out_i*H."""
    def kernel(*refs):
        obs_ref, w1_ref, b1_ref, w2_ref, b2_ref, w3_ref, b3_ref = refs[:7]
        head_refs = refs[7:7 + 2 * num_heads]
        out_refs = refs[7 + 2 * num_heads:]

        cdt = w1_ref.dtype   # MXU operand dtype (bf16 or f32); accumulation is always f32
        x = obs_ref[...].astype(cdt)

        # layer1 + ReLU
        h1 = jnp.dot(x, w1_ref[...], preferred_element_type=jnp.float32) + b1_ref[...]
        h1 = jnp.maximum(h1, 0.0)

        # norm1 (affine folded into w2/b2) -> layer2 + residual + ReLU
        n1 = _ln_normalize(h1)
        h2 = jnp.dot(n1.astype(cdt), w2_ref[...],
                     preferred_element_type=jnp.float32) + b2_ref[...]
        h2 = jnp.maximum(h2 + h1, 0.0)

        # norm2 (affine folded into w3/b3) -> layer3 + ReLU
        n2 = _ln_normalize(h2)
        h3 = jnp.dot(n2.astype(cdt), w3_ref[...],
                     preferred_element_type=jnp.float32) + b3_ref[...]
        h3 = jnp.maximum(h3, 0.0)

        # norm3 (affine folded into head weights) -> per-head logits stored directly
        # to separate (TB, d_i) outputs (no 128-lane padded slab, no wrapper re-slice).
        n3 = _ln_normalize(h3).astype(cdt)
        for h in range(num_heads):
            wh_ref = head_refs[2 * h]
            bh_ref = head_refs[2 * h + 1]
            logit = jnp.dot(n3, wh_ref[...],
                            preferred_element_type=jnp.float32) + bh_ref[...]
            out_refs[h][...] = logit.astype(out_refs[h].dtype)
    return kernel


def init_params(key, in_dim, out_dims):
    """Synthetic parameters with PyTorch Linear/LayerNorm shapes (weights pre-transposed)."""
    keys = jax.random.split(key, 10)

    def linear(k, fan_in, fan_out):
        kw, kb = jax.random.split(k)
        bound = 1.0 / math.sqrt(fan_in)
        w = jax.random.uniform(kw, (fan_in, fan_out), jnp.float32, -bound, bound)
        b = jax.random.uniform(kb, (1, fan_out), jnp.float32, -bound, bound)
        return w, b

    w1, b1 = linear(keys[0], in_dim, 64)
    w2, b2 = linear(keys[1], 64, 64)
    w3, b3 = linear(keys[2], 64, 32)

    head_w, head_b = [], []
    for hk, d in zip(jax.random.split(keys[3], len(out_dims)), out_dims):
        w, b = linear(hk, 32, d)
        head_w.append(w)
        head_b.append(b)

    # LayerNorm affine (randomized slightly so the fold is actually exercised).
    g1 = 1.0 + 0.1 * jax.random.normal(keys[4], (1, 64), jnp.float32)
    be1 = 0.1 * jax.random.normal(keys[5], (1, 64), jnp.float32)
    g2 = 1.0 + 0.1 * jax.random.normal(keys[6], (1, 64), jnp.float32)
    be2 = 0.1 * jax.random.normal(keys[7], (1, 64), jnp.float32)
    g3 = 1.0 + 0.1 * jax.random.normal(keys[8], (1, 32), jnp.float32)
    be3 = 0.1 * jax.random.normal(keys[9], (1, 32), jnp.float32)

    return dict(w1=w1, b1=b1, w2=w2, b2=b2, w3=w3, b3=b3,
                g1=g1, be1=be1, g2=g2, be2=be2, g3=g3, be3=be3,
                head_w=tuple(head_w), head_b=tuple(head_b))


def _fold_params(params, use_bf16):
    """Fold each LayerNorm affine into the following matmul; cast MXU operands."""
    mdt = jnp.bfloat16 if use_bf16 else jnp.float32

    w2f = params["g1"].reshape(-1, 1) * params["w2"]
    b2f = params["b2"] + params["be1"] @ params["w2"]
    w3f = params["g2"].reshape(-1, 1) * params["w3"]
    b3f = params["b3"] + params["be2"] @ params["w3"]
    head_w = [(params["g3"].reshape(-1, 1) * w).astype(mdt) for w in params["head_w"]]
    head_b = [b + params["be3"] @ w for w, b in zip(params["head_w"], params["head_b"])]

    return dict(w1=params["w1"].astype(mdt), b1=params["b1"],
                w2=w2f.astype(mdt), b2=b2f,
                w3=w3f.astype(mdt), b3=b3f,
                head_w=head_w, head_b=head_b)


def _tile_batch(B):
    """Pick (TB, n_blocks): big tiles to amortize the ~0.35 us/step overhead, and an
    even number of comparable blocks so v7x's two TensorCores are load-balanced."""
    if B <= 8:
        return B, 1
    pairs = -(-B // (2 * TB_MAX))        # ceil(B / (2*TB_MAX))
    n_blocks = 2 * pairs                 # even -> balanced across 2 TCs on v7x
    tb = -(-B // n_blocks)               # ceil(B / n_blocks)
    tb = ((tb + 7) // 8) * 8             # sublane-align rows
    n_blocks = -(-B // tb)
    return tb, n_blocks


@functools.partial(jax.jit, static_argnames=("out_dims", "use_bf16"))
def ppo_actor_forward(obs, params, out_dims, use_bf16=True):
    B, in_dim = obs.shape
    num_heads = len(out_dims)
    total_out = sum(out_dims)

    fp = _fold_params(params, use_bf16)
    if use_bf16:
        # Halves the per-row obs DMA into the kernel; in a real pipeline this cast
        # fuses with the upstream producer of obs.
        obs = obs.astype(jnp.bfloat16)

    TB, n_blocks = _tile_batch(B)

    args = [obs, fp["w1"], fp["b1"], fp["w2"], fp["b2"], fp["w3"], fp["b3"]]
    for w, b in zip(fp["head_w"], fp["head_b"]):
        args += [w, b]

    # obs / per-head outputs are tiled over the batch grid (partial last block handled
    # by Pallas: out-of-bounds rows are garbage whose stores are dropped). All weights
    # and biases get full-array blocks that stay VMEM-resident across grid steps.
    in_specs = [pl.BlockSpec((TB, in_dim), lambda i: (i, 0))]
    in_specs += [pl.BlockSpec(a.shape, lambda i: (0, 0)) for a in args[1:]]

    out_shape = tuple(jax.ShapeDtypeStruct((B, d), jnp.float32) for d in out_dims)
    out_specs = tuple(pl.BlockSpec((TB, d), lambda i: (i, 0)) for d in out_dims)

    obs_bytes = obs.size * obs.dtype.itemsize
    w_bytes = sum(a.size * a.dtype.itemsize for a in args[1:])
    out_bytes = B * total_out * 4
    ln_flops = 2 * (64 + 64 + 32) if LN_SUMS_ON_MXU else 0
    cost = pl.CostEstimate(
        flops=2 * B * (in_dim * 64 + 64 * 64 + 64 * 32 + 32 * total_out + ln_flops),
        transcendentals=3 * B,
        bytes_accessed=obs_bytes + w_bytes + out_bytes)

    outs = pl.pallas_call(
        _make_kernel(num_heads),
        out_shape=out_shape,
        grid=(n_blocks,),
        in_specs=in_specs,
        out_specs=out_specs,
        compiler_params=pltpu.CompilerParams(
            dimension_semantics=("parallel",),   # shard grid steps across v7x's 2 TCs
        ),
        cost_estimate=cost,
    )(*args)
    return list(outs)


def reference_forward(obs, params, out_dims):
    """Pure-JAX reference matching the PyTorch forward (unfolded params)."""
    def ln(x, g, b):
        m = jnp.mean(x, axis=-1, keepdims=True)
        v = jnp.mean((x - m) ** 2, axis=-1, keepdims=True)
        return (x - m) / jnp.sqrt(v + LN_EPS) * g + b

    x = jnp.maximum(obs @ params["w1"] + params["b1"], 0.0)
    sc = x
    x = ln(x, params["g1"], params["be1"])
    x = jnp.maximum(x @ params["w2"] + params["b2"] + sc, 0.0)
    x = ln(x, params["g2"], params["be2"])
    x = jnp.maximum(x @ params["w3"] + params["b3"], 0.0)
    x = ln(x, params["g3"], params["be3"])
    return [x @ w + b for w, b in zip(params["head_w"], params["head_b"])]


if __name__ == "__main__":
    key = jax.random.PRNGKey(0)
    k_obs, k_obs2, k_par = jax.random.split(key, 3)

    in_dim = 16
    out_dims = (4, 6)   # PPOActor(in_dim=16, out_dim=[4, 6])
    params = init_params(k_par, in_dim, out_dims)

    # 1) Small batch, f32 MXU operands: tight numeric check, single grid block.
    obs = jax.random.normal(k_obs, (8, in_dim), dtype=jnp.float32)
    got = ppo_actor_forward(obs, params, out_dims, use_bf16=False)
    got = [jax.block_until_ready(g) for g in got]
    want = reference_forward(obs, params, out_dims)
    for g, w, d in zip(got, want, out_dims):
        assert g.shape == (8, d), g.shape
        assert jnp.allclose(g, w, atol=1e-4, rtol=1e-4), "mismatch vs reference (B=8, f32)"

    # 2) Medium batch, f32: exercises the 2-block balanced grid + partial last block.
    obs2 = jax.random.normal(k_obs2, (600, in_dim), dtype=jnp.float32)
    got2 = ppo_actor_forward(obs2, params, out_dims, use_bf16=False)
    got2 = [jax.block_until_ready(g) for g in got2]
    want2 = reference_forward(obs2, params, out_dims)
    for g, w, d in zip(got2, want2, out_dims):
        assert g.shape == (600, d), g.shape
        assert jnp.allclose(g, w, atol=1e-4, rtol=1e-4), "mismatch vs reference (B=600, f32)"

    # 3) Production path: bf16 MXU operands (f32 accumulation / f32 LayerNorm math).
    #    Tolerance relaxed for bf16 operand rounding.
    got3 = ppo_actor_forward(obs2, params, out_dims, use_bf16=True)
    got3 = [jax.block_until_ready(g) for g in got3]
    for g, w, d in zip(got3, want2, out_dims):
        assert g.shape == (600, d), g.shape
        assert bool(jnp.all(jnp.isfinite(g))), "non-finite logits (B=600, bf16)"
        assert jnp.allclose(g, w, atol=1e-1, rtol=1e-1), "mismatch vs reference (B=600, bf16)"

    print("KERNEL_OK")
</pallas_src>

<mosaic_0001>
module attributes {stable_mosaic.version = 11 : i64} {
  func.func @kernel(%arg0: i32, %arg1: memref<8x16xf32, #tpu.memory_space<vmem>>, %arg2: memref<16x64xf32, #tpu.memory_space<vmem>>, %arg3: memref<1x64xf32, #tpu.memory_space<vmem>>, %arg4: memref<64x64xf32, #tpu.memory_space<vmem>>, %arg5: memref<1x64xf32, #tpu.memory_space<vmem>>, %arg6: memref<64x32xf32, #tpu.memory_space<vmem>>, %arg7: memref<1x32xf32, #tpu.memory_space<vmem>>, %arg8: memref<32x4xf32, #tpu.memory_space<vmem>>, %arg9: memref<1x4xf32, #tpu.memory_space<vmem>>, %arg10: memref<32x6xf32, #tpu.memory_space<vmem>>, %arg11: memref<1x6xf32, #tpu.memory_space<vmem>>, %arg12: memref<8x4xf32, #tpu.memory_space<vmem>>, %arg13: memref<8x6xf32, #tpu.memory_space<vmem>>) attributes {dimension_semantics = [#tpu.dimension_semantics<parallel>], iteration_bounds = array<i64: 1>, scalar_prefetch = 0 : i64, scratch_operands = 0 : i64, tpu.core_type = #tpu.core_type<tc>, window_params = [{transform_indices = @transform_0, window_bounds = array<i64: 8, 16>}, {pipeline_mode = #tpu.pipeline_mode<synchronous>, transform_indices = @transform_1, window_bounds = array<i64: 16, 64>}, {pipeline_mode = #tpu.pipeline_mode<synchronous>, transform_indices = @transform_2, window_bounds = array<i64: 1, 64>}, {pipeline_mode = #tpu.pipeline_mode<synchronous>, transform_indices = @transform_3, window_bounds = array<i64: 64, 64>}, {pipeline_mode = #tpu.pipeline_mode<synchronous>, transform_indices = @transform_4, window_bounds = array<i64: 1, 64>}, {pipeline_mode = #tpu.pipeline_mode<synchronous>, transform_indices = @transform_5, window_bounds = array<i64: 64, 32>}, {pipeline_mode = #tpu.pipeline_mode<synchronous>, transform_indices = @transform_6, window_bounds = array<i64: 1, 32>}, {pipeline_mode = #tpu.pipeline_mode<synchronous>, transform_indices = @transform_7, window_bounds = array<i64: 32, 4>}, {pipeline_mode = #tpu.pipeline_mode<synchronous>, transform_indices = @transform_8, window_bounds = array<i64: 1, 4>}, {pipeline_mode = #tpu.pipeline_mode<synchronous>, transform_indices = @transform_9, window_bounds = array<i64: 32, 6>}, {pipeline_mode = #tpu.pipeline_mode<synchronous>, transform_indices = @transform_10, window_bounds = array<i64: 1, 6>}, {transform_indices = @transform_11, window_bounds = array<i64: 8, 4>}, {transform_indices = @transform_12, window_bounds = array<i64: 8, 6>}]} {
    %c0 = arith.constant 0 : index
    %c0_0 = arith.constant 0 : index
    %0 = vector.load %arg1[%c0, %c0_0] : memref<8x16xf32, #tpu.memory_space<vmem>>, vector<8x16xf32>
    %c0_1 = arith.constant 0 : index
    %c0_2 = arith.constant 0 : index
    %1 = vector.load %arg2[%c0_1, %c0_2] : memref<16x64xf32, #tpu.memory_space<vmem>>, vector<16x64xf32>
    %cst = arith.constant dense<0.000000e+00> : vector<8x64xf32>
    %2 = tpu.matmul %0, %1, %cst {dimension_numbers = #tpu.dot_dimension_numbers<[1], [0], [0], [1], [0, 0, 1, 1], [], []>} : vector<8x16xf32>, vector<16x64xf32>, vector<8x64xf32> -> vector<8x64xf32>
    %c0_3 = arith.constant 0 : index
    %c0_4 = arith.constant 0 : index
    %3 = vector.load %arg3[%c0_3, %c0_4] : memref<1x64xf32, #tpu.memory_space<vmem>>, vector<1x64xf32>
    %4 = vector.broadcast %3 : vector<1x64xf32> to vector<8x64xf32>
    %5 = arith.addf %2, %4 : vector<8x64xf32>
    %cst_5 = arith.constant 0.000000e+00 : f32
    %6 = vector.broadcast %cst_5 : f32 to vector<8x64xf32>
    %7 = arith.maximumf %5, %6 : vector<8x64xf32>
    %cst_6 = arith.constant 1.000000e+00 : f32
    %8 = vector.broadcast %cst_6 : f32 to vector<64x1xf32>
    %cst_7 = arith.constant dense<0.000000e+00> : vector<8x1xf32>
    %9 = tpu.matmul %7, %8, %cst_7 {dimension_numbers = #tpu.dot_dimension_numbers<[1], [0], [0], [1], [0, 0, 1, 1], [], []>} : vector<8x64xf32>, vector<64x1xf32>, vector<8x1xf32> -> vector<8x1xf32>
    %10 = arith.mulf %7, %7 : vector<8x64xf32>
    %cst_8 = arith.constant dense<0.000000e+00> : vector<8x1xf32>
    %11 = tpu.matmul %10, %8, %cst_8 {dimension_numbers = #tpu.dot_dimension_numbers<[1], [0], [0], [1], [0, 0, 1, 1], [], []>} : vector<8x64xf32>, vector<64x1xf32>, vector<8x1xf32> -> vector<8x1xf32>
    %cst_9 = arith.constant 1.562500e-02 : f32
    %12 = vector.broadcast %cst_9 : f32 to vector<8x1xf32>
    %13 = arith.mulf %9, %12 : vector<8x1xf32>
    %cst_10 = arith.constant 1.562500e-02 : f32
    %14 = vector.broadcast %cst_10 : f32 to vector<8x1xf32>
    %15 = arith.mulf %11, %14 : vector<8x1xf32>
    %16 = arith.mulf %13, %13 : vector<8x1xf32>
    %17 = arith.subf %15, %16 : vector<8x1xf32>
    %cst_11 = arith.constant 0.000000e+00 : f32
    %18 = vector.broadcast %cst_11 : f32 to vector<8x1xf32>
    %19 = arith.maximumf %17, %18 : vector<8x1xf32>
    %cst_12 = arith.constant 9.99999974E-6 : f32
    %20 = vector.broadcast %cst_12 : f32 to vector<8x1xf32>
    %21 = arith.addf %19, %20 : vector<8x1xf32>
    %22 = math.rsqrt %21 : vector<8x1xf32>
    %23 = vector.broadcast %13 : vector<8x1xf32> to vector<8x64xf32>
    %24 = arith.subf %7, %23 : vector<8x64xf32>
    %25 = vector.broadcast %22 : vector<8x1xf32> to vector<8x64xf32>
    %26 = arith.mulf %24, %25 : vector<8x64xf32>
    %c0_13 = arith.constant 0 : index
    %c0_14 = arith.constant 0 : index
    %27 = vector.load %arg4[%c0_13, %c0_14] : memref<64x64xf32, #tpu.memory_space<vmem>>, vector<64x64xf32>
    %cst_15 = arith.constant dense<0.000000e+00> : vector<8x64xf32>
    %28 = tpu.matmul %26, %27, %cst_15 {dimension_numbers = #tpu.dot_dimension_numbers<[1], [0], [0], [1], [0, 0, 1, 1], [], []>} : vector<8x64xf32>, vector<64x64xf32>, vector<8x64xf32> -> vector<8x64xf32>
    %c0_16 = arith.constant 0 : index
    %c0_17 = arith.constant 0 : index
    %29 = vector.load %arg5[%c0_16, %c0_17] : memref<1x64xf32, #tpu.memory_space<vmem>>, vector<1x64xf32>
    %30 = vector.broadcast %29 : vector<1x64xf32> to vector<8x64xf32>
    %31 = arith.addf %28, %30 : vector<8x64xf32>
    %32 = arith.addf %31, %7 : vector<8x64xf32>
    %cst_18 = arith.constant 0.000000e+00 : f32
    %33 = vector.broadcast %cst_18 : f32 to vector<8x64xf32>
    %34 = arith.maximumf %32, %33 : vector<8x64xf32>
    %cst_19 = arith.constant 1.000000e+00 : f32
    %35 = vector.broadcast %cst_19 : f32 to vector<64x1xf32>
    %cst_20 = arith.constant dense<0.000000e+00> : vector<8x1xf32>
    %36 = tpu.matmul %34, %35, %cst_20 {dimension_numbers = #tpu.dot_dimension_numbers<[1], [0], [0], [1], [0, 0, 1, 1], [], []>} : vector<8x64xf32>, vector<64x1xf32>, vector<8x1xf32> -> vector<8x1xf32>
    %37 = arith.mulf %34, %34 : vector<8x64xf32>
    %cst_21 = arith.constant dense<0.000000e+00> : vector<8x1xf32>
    %38 = tpu.matmul %37, %35, %cst_21 {dimension_numbers = #tpu.dot_dimension_numbers<[1], [0], [0], [1], [0, 0, 1, 1], [], []>} : vector<8x64xf32>, vector<64x1xf32>, vector<8x1xf32> -> vector<8x1xf32>
    %cst_22 = arith.constant 1.562500e-02 : f32
    %39 = vector.broadcast %cst_22 : f32 to vector<8x1xf32>
    %40 = arith.mulf %36, %39 : vector<8x1xf32>
    %cst_23 = arith.constant 1.562500e-02 : f32
    %41 = vector.broadcast %cst_23 : f32 to vector<8x1xf32>
    %42 = arith.mulf %38, %41 : vector<8x1xf32>
    %43 = arith.mulf %40, %40 : vector<8x1xf32>
    %44 = arith.subf %42, %43 : vector<8x1xf32>
    %cst_24 = arith.constant 0.000000e+00 : f32
    %45 = vector.broadcast %cst_24 : f32 to vector<8x1xf32>
    %46 = arith.maximumf %44, %45 : vector<8x1xf32>
    %cst_25 = arith.constant 9.99999974E-6 : f32
    %47 = vector.broadcast %cst_25 : f32 to vector<8x1xf32>
    %48 = arith.addf %46, %47 : vector<8x1xf32>
    %49 = math.rsqrt %48 : vector<8x1xf32>
    %50 = vector.broadcast %40 : vector<8x1xf32> to vector<8x64xf32>
    %51 = arith.subf %34, %50 : vector<8x64xf32>
    %52 = vector.broadcast %49 : vector<8x1xf32> to vector<8x64xf32>
    %53 = arith.mulf %51, %52 : vector<8x64xf32>
    %c0_26 = arith.constant 0 : index
    %c0_27 = arith.constant 0 : index
    %54 = vector.load %arg6[%c0_26, %c0_27] : memref<64x32xf32, #tpu.memory_space<vmem>>, vector<64x32xf32>
    %cst_28 = arith.constant dense<0.000000e+00> : vector<8x32xf32>
    %55 = tpu.matmul %53, %54, %cst_28 {dimension_numbers = #tpu.dot_dimension_numbers<[1], [0], [0], [1], [0, 0, 1, 1], [], []>} : vector<8x64xf32>, vector<64x32xf32>, vector<8x32xf32> -> vector<8x32xf32>
    %c0_29 = arith.constant 0 : index
    %c0_30 = arith.constant 0 : index
    %56 = vector.load %arg7[%c0_29, %c0_30] : memref<1x32xf32, #tpu.memory_space<vmem>>, vector<1x32xf32>
    %57 = vector.broadcast %56 : vector<1x32xf32> to vector<8x32xf32>
    %58 = arith.addf %55, %57 : vector<8x32xf32>
    %cst_31 = arith.constant 0.000000e+00 : f32
    %59 = vector.broadcast %cst_31 : f32 to vector<8x32xf32>
    %60 = arith.maximumf %58, %59 : vector<8x32xf32>
    %cst_32 = arith.constant 1.000000e+00 : f32
    %61 = vector.broadcast %cst_32 : f32 to vector<32x1xf32>
    %cst_33 = arith.constant dense<0.000000e+00> : vector<8x1xf32>
    %62 = tpu.matmul %60, %61, %cst_33 {dimension_numbers = #tpu.dot_dimension_numbers<[1], [0], [0], [1], [0, 0, 1, 1], [], []>} : vector<8x32xf32>, vector<32x1xf32>, vector<8x1xf32> -> vector<8x1xf32>
    %63 = arith.mulf %60, %60 : vector<8x32xf32>
    %cst_34 = arith.constant dense<0.000000e+00> : vector<8x1xf32>
    %64 = tpu.matmul %63, %61, %cst_34 {dimension_numbers = #tpu.dot_dimension_numbers<[1], [0], [0], [1], [0, 0, 1, 1], [], []>} : vector<8x32xf32>, vector<32x1xf32>, vector<8x1xf32> -> vector<8x1xf32>
    %cst_35 = arith.constant 3.125000e-02 : f32
    %65 = vector.broadcast %cst_35 : f32 to vector<8x1xf32>
    %66 = arith.mulf %62, %65 : vector<8x1xf32>
    %cst_36 = arith.constant 3.125000e-02 : f32
    %67 = vector.broadcast %cst_36 : f32 to vector<8x1xf32>
    %68 = arith.mulf %64, %67 : vector<8x1xf32>
    %69 = arith.mulf %66, %66 : vector<8x1xf32>
    %70 = arith.subf %68, %69 : vector<8x1xf32>
    %cst_37 = arith.constant 0.000000e+00 : f32
    %71 = vector.broadcast %cst_37 : f32 to vector<8x1xf32>
    %72 = arith.maximumf %70, %71 : vector<8x1xf32>
    %cst_38 = arith.constant 9.99999974E-6 : f32
    %73 = vector.broadcast %cst_38 : f32 to vector<8x1xf32>
    %74 = arith.addf %72, %73 : vector<8x1xf32>
    %75 = math.rsqrt %74 : vector<8x1xf32>
    %76 = vector.broadcast %66 : vector<8x1xf32> to vector<8x32xf32>
    %77 = arith.subf %60, %76 : vector<8x32xf32>
    %78 = vector.broadcast %75 : vector<8x1xf32> to vector<8x32xf32>
    %79 = arith.mulf %77, %78 : vector<8x32xf32>
    %c0_39 = arith.constant 0 : index
    %c0_40 = arith.constant 0 : index
    %80 = vector.load %arg8[%c0_39, %c0_40] : memref<32x4xf32, #tpu.memory_space<vmem>>, vector<32x4xf32>
    %cst_41 = arith.constant dense<0.000000e+00> : vector<8x4xf32>
    %81 = tpu.matmul %79, %80, %cst_41 {dimension_numbers = #tpu.dot_dimension_numbers<[1], [0], [0], [1], [0, 0, 1, 1], [], []>} : vector<8x32xf32>, vector<32x4xf32>, vector<8x4xf32> -> vector<8x4xf32>
    %c0_42 = arith.constant 0 : index
    %c0_43 = arith.constant 0 : index
    %82 = vector.load %arg9[%c0_42, %c0_43] : memref<1x4xf32, #tpu.memory_space<vmem>>, vector<1x4xf32>
    %83 = vector.broadcast %82 : vector<1x4xf32> to vector<8x4xf32>
    %84 = arith.addf %81, %83 : vector<8x4xf32>
    %c0_44 = arith.constant 0 : index
    %c0_45 = arith.constant 0 : index
    %85 = vector.load %arg12[%c0_44, %c0_45] : memref<8x4xf32, #tpu.memory_space<vmem>>, vector<8x4xf32>
    tpu.vector_store %arg12[%c0_44, %c0_45], %84 {strides = array<i32>} : memref<8x4xf32, #tpu.memory_space<vmem>>, vector<8x4xf32>,
    %c0_46 = arith.constant 0 : index
    %c0_47 = arith.constant 0 : index
    %86 = vector.load %arg10[%c0_46, %c0_47] : memref<32x6xf32, #tpu.memory_space<vmem>>, vector<32x6xf32>
    %cst_48 = arith.constant dense<0.000000e+00> : vector<8x6xf32>
    %87 = tpu.matmul %79, %86, %cst_48 {dimension_numbers = #tpu.dot_dimension_numbers<[1], [0], [0], [1], [0, 0, 1, 1], [], []>} : vector<8x32xf32>, vector<32x6xf32>, vector<8x6xf32> -> vector<8x6xf32>
    %c0_49 = arith.constant 0 : index
    %c0_50 = arith.constant 0 : index
    %88 = vector.load %arg11[%c0_49, %c0_50] : memref<1x6xf32, #tpu.memory_space<vmem>>, vector<1x6xf32>
    %89 = vector.broadcast %88 : vector<1x6xf32> to vector<8x6xf32>
    %90 = arith.addf %87, %89 : vector<8x6xf32>
    %c0_51 = arith.constant 0 : index
    %c0_52 = arith.constant 0 : index
    %91 = vector.load %arg13[%c0_51, %c0_52] : memref<8x6xf32, #tpu.memory_space<vmem>>, vector<8x6xf32>
    tpu.vector_store %arg13[%c0_51, %c0_52], %90 {strides = array<i32>} : memref<8x6xf32, #tpu.memory_space<vmem>>, vector<8x6xf32>,
    return
  }
  func.func @transform_0(%arg0: i32) -> (i32, i32) {
    %c0_i32 = arith.constant 0 : i32
    %c0_i32_0 = arith.constant 0 : i32
    return %arg0, %c0_i32 : i32, i32
  }
  func.func @transform_1(%arg0: i32) -> (i32, i32) {
    %c0_i32 = arith.constant 0 : i32
    %c0_i32_0 = arith.constant 0 : i32
    %c0_i32_1 = arith.constant 0 : i32
    return %c0_i32, %c0_i32_0 : i32, i32
  }
  func.func @transform_2(%arg0: i32) -> (i32, i32) {
    %c0_i32 = arith.constant 0 : i32
    %c0_i32_0 = arith.constant 0 : i32
    %c0_i32_1 = arith.constant 0 : i32
    return %c0_i32, %c0_i32_0 : i32, i32
  }
  func.func @transform_3(%arg0: i32) -> (i32, i32) {
    %c0_i32 = arith.constant 0 : i32
    %c0_i32_0 = arith.constant 0 : i32
    %c0_i32_1 = arith.constant 0 : i32
    return %c0_i32, %c0_i32_0 : i32, i32
  }
  func.func @transform_4(%arg0: i32) -> (i32, i32) {
    %c0_i32 = arith.constant 0 : i32
    %c0_i32_0 = arith.constant 0 : i32
    %c0_i32_1 = arith.constant 0 : i32
    return %c0_i32, %c0_i32_0 : i32, i32
  }
  func.func @transform_5(%arg0: i32) -> (i32, i32) {
    %c0_i32 = arith.constant 0 : i32
    %c0_i32_0 = arith.constant 0 : i32
    %c0_i32_1 = arith.constant 0 : i32
    return %c0_i32, %c0_i32_0 : i32, i32
  }
  func.func @transform_6(%arg0: i32) -> (i32, i32) {
    %c0_i32 = arith.constant 0 : i32
    %c0_i32_0 = arith.constant 0 : i32
    %c0_i32_1 = arith.constant 0 : i32
    return %c0_i32, %c0_i32_0 : i32, i32
  }
  func.func @transform_7(%arg0: i32) -> (i32, i32) {
    %c0_i32 = arith.constant 0 : i32
    %c0_i32_0 = arith.constant 0 : i32
    %c0_i32_1 = arith.constant 0 : i32
    return %c0_i32, %c0_i32_0 : i32, i32
  }
  func.func @transform_8(%arg0: i32) -> (i32, i32) {
    %c0_i32 = arith.constant 0 : i32
    %c0_i32_0 = arith.constant 0 : i32
    %c0_i32_1 = arith.constant 0 : i32
    return %c0_i32, %c0_i32_0 : i32, i32
  }
  func.func @transform_9(%arg0: i32) -> (i32, i32) {
    %c0_i32 = arith.constant 0 : i32
    %c0_i32_0 = arith.constant 0 : i32
    %c0_i32_1 = arith.constant 0 : i32
    return %c0_i32, %c0_i32_0 : i32, i32
  }
  func.func @transform_10(%arg0: i32) -> (i32, i32) {
    %c0_i32 = arith.constant 0 : i32
    %c0_i32_0 = arith.constant 0 : i32
    %c0_i32_1 = arith.constant 0 : i32
    return %c0_i32, %c0_i32_0 : i32, i32
  }
  func.func @transform_11(%arg0: i32) -> (i32, i32) {
    %c0_i32 = arith.constant 0 : i32
    %c0_i32_0 = arith.constant 0 : i32
    return %arg0, %c0_i32 : i32, i32
  }
  func.func @transform_12(%arg0: i32) -> (i32, i32) {
    %c0_i32 = arith.constant 0 : i32
    %c0_i32_0 = arith.constant 0 : i32
    return %arg0, %c0_i32 : i32, i32
  }
}

</mosaic_0001>

<llo_original>
// kernel: ppo_actor_forward.1
$region0: #{ppo_actor_forward.1}
  #allocation0 [shape = 'u32[]', space=smem, size = 0x4, offset = 0x4, fixed_abs, tag = 'smem constant byte address 0x4 - core index']
  #allocation1 [shape = 'u32[72,128]{1,0:T(1,128)}', space=vmem, size = 0x9000, scoped, tag = 'internal scratch']
  %s0 = inlined_call_operand.vmem [shape: f32[8,16], index: 0, kind: input, shape index: {}]
  %s1 = inlined_call_operand.vmem [shape: f32[16,64], index: 1, kind: input, shape index: {}]
  %s2 = inlined_call_operand.vmem [shape: f32[1,64], index: 2, kind: input, shape index: {}]
  %s3 = inlined_call_operand.vmem [shape: f32[64,64], index: 3, kind: input, shape index: {}]
  %s4 = inlined_call_operand.vmem [shape: f32[1,64], index: 4, kind: input, shape index: {}]
  %s5 = inlined_call_operand.vmem [shape: f32[64,32], index: 5, kind: input, shape index: {}]
  %s6 = inlined_call_operand.vmem [shape: f32[1,32], index: 6, kind: input, shape index: {}]
  %s7 = inlined_call_operand.vmem [shape: f32[32,4], index: 7, kind: input, shape index: {}]
  %s8 = inlined_call_operand.vmem [shape: f32[1,4], index: 8, kind: input, shape index: {}]
  %s9 = inlined_call_operand.vmem [shape: f32[32,6], index: 9, kind: input, shape index: {}]
  %s10 = inlined_call_operand.vmem [shape: f32[1,6], index: 10, kind: input, shape index: {}]
  %s11 = inlined_call_operand.vmem [shape: f32[8,4], index: 11, kind: output, shape index: {0}]
  %s12 = inlined_call_operand.hbm [shape: f32[8,6], index: 12, kind: output, shape index: {1}]
  %13 = xla_tuple %s11, %s12
  %s14 = sld [smem:[#allocation0]]
  $region62: #{ppo_actor_forward.1} parent=0
    _
  %s16 = ssub.s32 1, %s14
  %s17 = scalar_select 0, %s16, %s14
  $region1: #{ppo_actor_forward.1} parent=0
    #allocation2 [shape = 'u8[4096]{0}', space=vmem, size = 0x1000, scoped, tag = 'output window, operand 1, single buffered']
    #allocation3 [shape = 's32[1]{0}', space=sflag, size = 0x4, scoped, tag = 'scoped memory for ppo_actor_forward.1']
    %18 = vsyncpa [#allocation3], 0
    // Predicated region
    $region2: #{ppo_actor_forward.1} parent=1 // pred_check
      _
    $region3: #{ppo_actor_forward.1} parent=1 // pred_check_branch
      %20 = sbr.rel (0) target = $region5
    $region4: #{ppo_actor_forward.1} parent=1 // pred_region
      _
    $region5: #{ppo_actor_forward.1} parent=1 // pred_fallthru
      _
    // Predicated region
    $region6: #{ppo_actor_forward.1} parent=1 // pred_check
      _
    $region7: #{ppo_actor_forward.1} parent=1 // pred_check_branch
      %22 = sbr.rel (0) target = $region9
    $region8: #{ppo_actor_forward.1} parent=1 // pred_region
      _
    $region9: #{ppo_actor_forward.1} parent=1 // pred_fallthru
      _
    // Predicated region
    $region10: #{ppo_actor_forward.1} parent=1 // pred_check
      _
    $region11: #{ppo_actor_forward.1} parent=1 // pred_check_branch
      %24 = sbr.rel (0) target = $region13
    $region12: #{ppo_actor_forward.1} parent=1 // pred_region
      _
    $region13: #{ppo_actor_forward.1} parent=1 // pred_fallthru
      _
    // Predicated region
    $region14: #{ppo_actor_forward.1} parent=1 // pred_check
      _
    $region15: #{ppo_actor_forward.1} parent=1 // pred_check_branch
      %26 = sbr.rel (0) target = $region17
    $region16: #{ppo_actor_forward.1} parent=1 // pred_region
      _
    $region17: #{ppo_actor_forward.1} parent=1 // pred_fallthru
      _
    // Predicated region
    $region18: #{ppo_actor_forward.1} parent=1 // pred_check
      _
    $region19: #{ppo_actor_forward.1} parent=1 // pred_check_branch
      %28 = sbr.rel (0) target = $region21
    $region20: #{ppo_actor_forward.1} parent=1 // pred_region
      _
    $region21: #{ppo_actor_forward.1} parent=1 // pred_fallthru
      _
    // Predicated region
    $region22: #{ppo_actor_forward.1} parent=1 // pred_check
      _
    $region23: #{ppo_actor_forward.1} parent=1 // pred_check_branch
      %30 = sbr.rel (0) target = $region25
    $region24: #{ppo_actor_forward.1} parent=1 // pred_region
      _
    $region25: #{ppo_actor_forward.1} parent=1 // pred_fallthru
      _
    // Predicated region
    $region26: #{ppo_actor_forward.1} parent=1 // pred_check
      _
    $region27: #{ppo_actor_forward.1} parent=1 // pred_check_branch
      %32 = sbr.rel (0) target = $region29
    $region28: #{ppo_actor_forward.1} parent=1 // pred_region
      _
    $region29: #{ppo_actor_forward.1} parent=1 // pred_fallthru
      _
    // Predicated region
    $region30: #{ppo_actor_forward.1} parent=1 // pred_check
      _
    $region31: #{ppo_actor_forward.1} parent=1 // pred_check_branch
      %34 = sbr.rel (0) target = $region33
    $region32: #{ppo_actor_forward.1} parent=1 // pred_region
      _
    $region33: #{ppo_actor_forward.1} parent=1 // pred_fallthru
      _
    // Predicated region
    $region34: #{ppo_actor_forward.1} parent=1 // pred_check
      _
    $region35: #{ppo_actor_forward.1} parent=1 // pred_check_branch
      %36 = sbr.rel (0) target = $region37
    $region36: #{ppo_actor_forward.1} parent=1 // pred_region
      _
    $region37: #{ppo_actor_forward.1} parent=1 // pred_fallthru
      _
    // Predicated region
    $region38: #{ppo_actor_forward.1} parent=1 // pred_check
      _
    $region39: #{ppo_actor_forward.1} parent=1 // pred_check_branch
      %38 = sbr.rel (0) target = $region41
    $region40: #{ppo_actor_forward.1} parent=1 // pred_region
      _
    $region41: #{ppo_actor_forward.1} parent=1 // pred_fallthru
      _
    // Predicated region
    $region42: #{ppo_actor_forward.1} parent=1 // pred_check
      _
    $region43: #{ppo_actor_forward.1} parent=1 // pred_check_branch
      %40 = sbr.rel (0) target = $region45
    $region44: #{ppo_actor_forward.1} parent=1 // pred_region
      _
    $region45: #{ppo_actor_forward.1} parent=1 // pred_fallthru
      _
    %v41 = vld [vmem:[%s0] sm:$0xff]
    %v42 = vld [vmem:[%s1] sm:$0xff]
    %v43 = vld [vmem:[%s1 + $0x8] sm:$0xff]
    %v44 = vld [vmem:[%s2] sm:$0x1]
    %v46 = vperm.slane %v44, 0
    %vm48 = vcmask 130048
    %v50 = vsel %vm48, %v41, 0
    %52 = vmatpush.msra.mxu0 0.0
    %53 = vmatpush.msra.mxu0 0.0
    %54 = vmatpush.msra.mxu0 0.0
    %55 = vmatpush.msra.mxu0 0.0
    %56 = vmatpush.msra.mxu0 0.0
    %57 = vmatpush.msra.mxu0 0.0
    %58 = vmatpush.msra.mxu0 0.0
    %59 = vmatpush.msra.mxu0 0.0
    %60 = vmatpush.msra.mxu0 0.0
    %61 = vmatpush.msra.mxu0 0.0
    %62 = vmatpush.msra.mxu0 0.0
    %63 = vmatpush.msra.mxu0 0.0
    %64 = vmatpush.msra.mxu0 0.0
    %65 = vmatpush.msra.mxu0 0.0
    %66 = vmatpush.msra.mxu0 %v43
    %67 = vmatpush.msra.mxu0 %v42
    %68 = vmatmul.f32.gmra.mxu0 %v50
    %v69 = vpop.f32.mrf.mxu0
    %v70 = vadd.f32 %v46, %v69
    %71 = vdwg.mxu0
    %v72 = vmax.f32 %v70, 0.0
    %vm73 = vcmask 523264
    %v75 = vsel %vm73, %v72, 0
    %77 = vmatpush.msra.mxu0 0.0
    %78 = vmatpush.msra.mxu0 0.0
    %79 = vmatpush.msra.mxu0 0.0
    %80 = vmatpush.msra.mxu0 0.0
    %81 = vmatpush.msra.mxu0 0.0
    %82 = vmatpush.msra.mxu0 0.0
    %83 = vmatpush.msra.mxu0 0.0
    %84 = vmatpush.msra.mxu0 0.0
    %85 = vmatpush.msra.mxu0 1.0
    %86 = vmatpush.msra.mxu0 1.0
    %87 = vmatpush.msra.mxu0 1.0
    %88 = vmatpush.msra.mxu0 1.0
    %89 = vmatpush.msra.mxu0 1.0
    %90 = vmatpush.msra.mxu0 1.0
    %91 = vmatpush.msra.mxu0 1.0
    %92 = vmatpush.msra.mxu0 1.0
    %93 = vmatmul.f32.gmra.mxu0 %v75
    %v94 = vpop.f32.mrf.mxu0
    %v95 = vadd.f32 0.0, %v94
    %96 = vdwg.mxu0
    %v97 = vmul.f32 %v72, %v72
    %v99 = vsel %vm73, %v97, 0
    %101 = vmatpush.msra.mxu0 0.0
    %102 = vmatpush.msra.mxu0 0.0
    %103 = vmatpush.msra.mxu0 0.0
    %104 = vmatpush.msra.mxu0 0.0
    %105 = vmatpush.msra.mxu0 0.0
    %106 = vmatpush.msra.mxu0 0.0
    %107 = vmatpush.msra.mxu0 0.0
    %108 = vmatpush.msra.mxu0 0.0
    %109 = vmatpush.msra.mxu0 1.0
    %110 = vmatpush.msra.mxu0 1.0
    %111 = vmatpush.msra.mxu0 1.0
    %112 = vmatpush.msra.mxu0 1.0
    %113 = vmatpush.msra.mxu0 1.0
    %114 = vmatpush.msra.mxu0 1.0
    %115 = vmatpush.msra.mxu0 1.0
    %116 = vmatpush.msra.mxu0 1.0
    %117 = vmatmul.f32.gmra.mxu0 %v99
    %v118 = vpop.f32.mrf.mxu0
    %v119 = vadd.f32 0.0, %v118
    %120 = vdwg.mxu0
    %v121 = vmul.f32 %v95, 0.015625
    %v122 = vmul.f32 %v119, 0.015625
    %v123 = vmul.f32 %v121, %v121
    %v124 = vsub.f32 %v122, %v123
    %v125 = vmax.f32 %v124, 0.0
    %v126 = vadd.f32 %v125, 1e-05
    %v127 = vrsqrt.pop %v126
    %v128 = vmul.f32 %v127, %v126
    %v129 = vmul.f32 %v128, %v127
    %v130 = vmul.f32 0.5, %v129
    %v131 = vsub.f32 1.5, %v130
    %v132 = vmul.f32 %v127, %v131
    %vm133 = vweird.f32 %v126
    %vm134 = vweird.f32 %v127
    %vm135 = vmor %vm133, %vm134
    %v136 = vsel %vm135, %v127, %v132
    %138 = vset.pattern.permute.xlu0 0
    %139 = vperm.xlu0 %138, %v121
    %v140 = vpop.permute.xlu0 %139
    %v142 = vsub.f32 %v72, %v140
    %144 = vset.pattern.permute.xlu0 0
    %145 = vperm.xlu0 %144, %v136
    %v146 = vpop.permute.xlu0 %145
    %v148 = vmul.f32 %v142, %v146
    %v149 = vld [vmem:[%s3] sm:$0xff]
    %v150 = vld [vmem:[%s3 + $0x8] sm:$0xff]
    %v151 = vld [vmem:[%s3 + $0x10] sm:$0xff]
    %v152 = vld [vmem:[%s3 + $0x18] sm:$0xff]
    %v153 = vld [vmem:[%s3 + $0x20] sm:$0xff]
    %v154 = vld [vmem:[%s3 + $0x28] sm:$0xff]
    %v155 = vld [vmem:[%s3 + $0x30] sm:$0xff]
    %v156 = vld [vmem:[%s3 + $0x38] sm:$0xff]
    %v157 = vld [vmem:[%s4] sm:$0x1]
    %v159 = vperm.slane %v157, 0
    %v162 = vsel %vm73, %v148, 0
    %164 = vmatpush.msra.mxu0 0.0
    %165 = vmatpush.msra.mxu0 0.0
    %166 = vmatpush.msra.mxu0 0.0
    %167 = vmatpush.msra.mxu0 0.0
    %168 = vmatpush.msra.mxu0 0.0
    %169 = vmatpush.msra.mxu0 0.0
    %170 = vmatpush.msra.mxu0 0.0
    %171 = vmatpush.msra.mxu0 0.0
    %172 = vmatpush.msra.mxu0 %v156
    %173 = vmatpush.msra.mxu0 %v155
    %174 = vmatpush.msra.mxu0 %v154
    %175 = vmatpush.msra.mxu0 %v153
    %176 = vmatpush.msra.mxu0 %v152
    %177 = vmatpush.msra.mxu0 %v151
    %178 = vmatpush.msra.mxu0 %v150
    %179 = vmatpush.msra.mxu0 %v149
    %180 = vmatmul.f32.gmra.mxu0 %v162
    %v181 = vpop.f32.mrf.mxu0
    %v182 = vadd.f32 %v159, %v181
    %183 = vdwg.mxu0
    %v184 = vadd.f32 %v182, %v72
    %v185 = vmax.f32 %v184, 0.0
    %v187 = vsel %vm73, %v185, 0
    %189 = vmatpush.msra.mxu0 0.0
    %190 = vmatpush.msra.mxu0 0.0
    %191 = vmatpush.msra.mxu0 0.0
    %192 = vmatpush.msra.mxu0 0.0
    %193 = vmatpush.msra.mxu0 0.0
    %194 = vmatpush.msra.mxu0 0.0
    %195 = vmatpush.msra.mxu0 0.0
    %196 = vmatpush.msra.mxu0 0.0
    %197 = vmatpush.msra.mxu0 1.0
    %198 = vmatpush.msra.mxu0 1.0
    %199 = vmatpush.msra.mxu0 1.0
    %200 = vmatpush.msra.mxu0 1.0
    %201 = vmatpush.msra.mxu0 1.0
    %202 = vmatpush.msra.mxu0 1.0
    %203 = vmatpush.msra.mxu0 1.0
    %204 = vmatpush.msra.mxu0 1.0
    %205 = vmatmul.f32.gmra.mxu0 %v187
    %v206 = vpop.f32.mrf.mxu0
    %v207 = vadd.f32 0.0, %v206
    %208 = vdwg.mxu0
    %v209 = vmul.f32 %v185, %v185
    %v211 = vsel %vm73, %v209, 0
    %213 = vmatpush.msra.mxu0 0.0
    %214 = vmatpush.msra.mxu0 0.0
    %215 = vmatpush.msra.mxu0 0.0
    %216 = vmatpush.msra.mxu0 0.0
    %217 = vmatpush.msra.mxu0 0.0
    %218 = vmatpush.msra.mxu0 0.0
    %219 = vmatpush.msra.mxu0 0.0
    %220 = vmatpush.msra.mxu0 0.0
    %221 = vmatpush.msra.mxu0 1.0
    %222 = vmatpush.msra.mxu0 1.0
    %223 = vmatpush.msra.mxu0 1.0
    %224 = vmatpush.msra.mxu0 1.0
    %225 = vmatpush.msra.mxu0 1.0
    %226 = vmatpush.msra.mxu0 1.0
    %227 = vmatpush.msra.mxu0 1.0
    %228 = vmatpush.msra.mxu0 1.0
    %229 = vmatmul.f32.gmra.mxu0 %v211
    %v230 = vpop.f32.mrf.mxu0
    %v231 = vadd.f32 0.0, %v230
    %232 = vdwg.mxu0
    %v233 = vmul.f32 %v207, 0.015625
    %v234 = vmul.f32 %v231, 0.015625
    %v235 = vmul.f32 %v233, %v233
    %v236 = vsub.f32 %v234, %v235
    %v237 = vmax.f32 %v236, 0.0
    %v238 = vadd.f32 %v237, 1e-05
    %v239 = vrsqrt.pop %v238
    %v240 = vmul.f32 %v239, %v238
    %v241 = vmul.f32 %v240, %v239
    %v242 = vmul.f32 0.5, %v241
    %v243 = vsub.f32 1.5, %v242
    %v244 = vmul.f32 %v239, %v243
    %vm245 = vweird.f32 %v238
    %vm246 = vweird.f32 %v239
    %vm247 = vmor %vm245, %vm246
    %v248 = vsel %vm247, %v239, %v244
    %250 = vset.pattern.permute.xlu0 0
    %251 = vperm.xlu0 %250, %v233
    %v252 = vpop.permute.xlu0 %251
    %v254 = vsub.f32 %v185, %v252
    %256 = vset.pattern.permute.xlu0 0
    %257 = vperm.xlu0 %256, %v248
    %v258 = vpop.permute.xlu0 %257
    %v260 = vmul.f32 %v254, %v258
    %v261 = vld [vmem:[%s5] sm:$0xff]
    %v262 = vld [vmem:[%s5 + $0x8] sm:$0xff]
    %v263 = vld [vmem:[%s5 + $0x10] sm:$0xff]
    %v264 = vld [vmem:[%s5 + $0x18] sm:$0xff]
    %v265 = vld [vmem:[%s5 + $0x20] sm:$0xff]
    %v266 = vld [vmem:[%s5 + $0x28] sm:$0xff]
    %v267 = vld [vmem:[%s5 + $0x30] sm:$0xff]
    %v268 = vld [vmem:[%s5 + $0x38] sm:$0xff]
    %v269 = vld [vmem:[%s6] sm:$0x1]
    %v271 = vperm.slane %v269, 0
    %v274 = vsel %vm73, %v260, 0
    %276 = vmatpush.msra.mxu0 0.0
    %277 = vmatpush.msra.mxu0 0.0
    %278 = vmatpush.msra.mxu0 0.0
    %279 = vmatpush.msra.mxu0 0.0
    %280 = vmatpush.msra.mxu0 0.0
    %281 = vmatpush.msra.mxu0 0.0
    %282 = vmatpush.msra.mxu0 0.0
    %283 = vmatpush.msra.mxu0 0.0
    %284 = vmatpush.msra.mxu0 %v268
    %285 = vmatpush.msra.mxu0 %v267
    %286 = vmatpush.msra.mxu0 %v266
    %287 = vmatpush.msra.mxu0 %v265
    %288 = vmatpush.msra.mxu0 %v264
    %289 = vmatpush.msra.mxu0 %v263
    %290 = vmatpush.msra.mxu0 %v262
    %291 = vmatpush.msra.mxu0 %v261
    %292 = vmatmul.f32.gmra.mxu0 %v274
    %v293 = vpop.f32.mrf.mxu0
    %v294 = vadd.f32 %v271, %v293
    %295 = vdwg.mxu0
    %v296 = vmax.f32 %v294, 0.0
    %vm297 = vcmask 261120
    %v299 = vsel %vm297, %v296, 0
    %301 = vmatpush.msra.mxu0 0.0
    %302 = vmatpush.msra.mxu0 0.0
    %303 = vmatpush.msra.mxu0 0.0
    %304 = vmatpush.msra.mxu0 0.0
    %305 = vmatpush.msra.mxu0 0.0
    %306 = vmatpush.msra.mxu0 0.0
    %307 = vmatpush.msra.mxu0 0.0
    %308 = vmatpush.msra.mxu0 0.0
    %309 = vmatpush.msra.mxu0 0.0
    %310 = vmatpush.msra.mxu0 0.0
    %311 = vmatpush.msra.mxu0 0.0
    %312 = vmatpush.msra.mxu0 0.0
    %313 = vmatpush.msra.mxu0 1.0
    %314 = vmatpush.msra.mxu0 1.0
    %315 = vmatpush.msra.mxu0 1.0
    %316 = vmatpush.msra.mxu0 1.0
    %317 = vmatmul.f32.gmra.mxu0 %v299
    %v318 = vpop.f32.mrf.mxu0
    %v319 = vadd.f32 0.0, %v318
    %320 = vdwg.mxu0
    %v321 = vmul.f32 %v296, %v296
    %v323 = vsel %vm297, %v321, 0
    %325 = vmatpush.msra.mxu0 0.0
    %326 = vmatpush.msra.mxu0 0.0
    %327 = vmatpush.msra.mxu0 0.0
    %328 = vmatpush.msra.mxu0 0.0
    %329 = vmatpush.msra.mxu0 0.0
    %330 = vmatpush.msra.mxu0 0.0
    %331 = vmatpush.msra.mxu0 0.0
    %332 = vmatpush.msra.mxu0 0.0
    %333 = vmatpush.msra.mxu0 0.0
    %334 = vmatpush.msra.mxu0 0.0
    %335 = vmatpush.msra.mxu0 0.0
    %336 = vmatpush.msra.mxu0 0.0
    %337 = vmatpush.msra.mxu0 1.0
    %338 = vmatpush.msra.mxu0 1.0
    %339 = vmatpush.msra.mxu0 1.0
    %340 = vmatpush.msra.mxu0 1.0
    %341 = vmatmul.f32.gmra.mxu0 %v323
    %v342 = vpop.f32.mrf.mxu0
    %v343 = vadd.f32 0.0, %v342
    %344 = vdwg.mxu0
    %v345 = vmul.f32 %v319, 0.03125
    %v346 = vmul.f32 %v343, 0.03125
    %v347 = vmul.f32 %v345, %v345
    %v348 = vsub.f32 %v346, %v347
    %v349 = vmax.f32 %v348, 0.0
    %v350 = vadd.f32 %v349, 1e-05
    %v351 = vrsqrt.pop %v350
    %v352 = vmul.f32 %v351, %v350
    %v353 = vmul.f32 %v352, %v351
    %v354 = vmul.f32 0.5, %v353
    %v355 = vsub.f32 1.5, %v354
    %v356 = vmul.f32 %v351, %v355
    %vm357 = vweird.f32 %v350
    %vm358 = vweird.f32 %v351
    %vm359 = vmor %vm357, %vm358
    %v360 = vsel %vm359, %v351, %v356
    %362 = vset.pattern.permute.xlu0 0
    %363 = vperm.xlu0 %362, %v345
    %v364 = vpop.permute.xlu0 %363
    %v366 = vsub.f32 %v296, %v364
    %368 = vset.pattern.permute.xlu0 0
    %369 = vperm.xlu0 %368, %v360
    %v370 = vpop.permute.xlu0 %369
    %v372 = vmul.f32 %v366, %v370
    %v373 = vld [vmem:[%s7] sm:$0xff]
    %v374 = vld [vmem:[%s7 + $0x8] sm:$0xff]
    %v375 = vld [vmem:[%s7 + $0x10] sm:$0xff]
    %v376 = vld [vmem:[%s7 + $0x18] sm:$0xff]
    %v377 = vld [vmem:[%s8] sm:$0x1]
    %v379 = vperm.slane %v377, 0
    %v382 = vsel %vm297, %v372, 0
    %384 = vmatpush.msra.mxu0 0.0
    %385 = vmatpush.msra.mxu0 0.0
    %386 = vmatpush.msra.mxu0 0.0
    %387 = vmatpush.msra.mxu0 0.0
    %388 = vmatpush.msra.mxu0 0.0
    %389 = vmatpush.msra.mxu0 0.0
    %390 = vmatpush.msra.mxu0 0.0
    %391 = vmatpush.msra.mxu0 0.0
    %392 = vmatpush.msra.mxu0 0.0
    %393 = vmatpush.msra.mxu0 0.0
    %394 = vmatpush.msra.mxu0 0.0
    %395 = vmatpush.msra.mxu0 0.0
    %396 = vmatpush.msra.mxu0 %v376
    %397 = vmatpush.msra.mxu0 %v375
    %398 = vmatpush.msra.mxu0 %v374
    %399 = vmatpush.msra.mxu0 %v373
    %400 = vmatmul.f32.gmra.mxu0 %v382
    %v401 = vpop.f32.mrf.mxu0
    %v402 = vadd.f32 %v379, %v401
    %403 = vdwg.mxu0
    %vm404 = vcmask 31744
    %405 = vst.msk [vmem:[%s11] sm:$0xff] %vm404, %v402
    %v406 = vld [vmem:[%s9] sm:$0xff]
    %v407 = vld [vmem:[%s9 + $0x8] sm:$0xff]
    %v408 = vld [vmem:[%s9 + $0x10] sm:$0xff]
    %v409 = vld [vmem:[%s9 + $0x18] sm:$0xff]
    %v410 = vld [vmem:[%s10] sm:$0x1]
    %v412 = vperm.slane %v410, 0
    %414 = vmatpush.msra.mxu0 0.0
    %415 = vmatpush.msra.mxu0 0.0
    %416 = vmatpush.msra.mxu0 0.0
    %417 = vmatpush.msra.mxu0 0.0
    %418 = vmatpush.msra.mxu0 0.0
    %419 = vmatpush.msra.mxu0 0.0
    %420 = vmatpush.msra.mxu0 0.0
    %421 = vmatpush.msra.mxu0 0.0
    %422 = vmatpush.msra.mxu0 0.0
    %423 = vmatpush.msra.mxu0 0.0
    %424 = vmatpush.msra.mxu0 0.0
    %425 = vmatpush.msra.mxu0 0.0
    %426 = vmatpush.msra.mxu0 %v409
    %427 = vmatpush.msra.mxu0 %v408
    %428 = vmatpush.msra.mxu0 %v407
    %429 = vmatpush.msra.mxu0 %v406
    %430 = vmatmul.f32.gmra.mxu0 %v382
    %v431 = vpop.f32.mrf.mxu0
    %v432 = vadd.f32 %v412, %v431
    %433 = vdwg.mxu0
    %vm434 = vcmask 48128
    %435 = vst.msk [vmem:[#allocation2] sm:$0xff] %vm434, %v432
    // Predicated region
    $region46: #{ppo_actor_forward.1} parent=1 // pred_check
      _
    $region47: #{ppo_actor_forward.1} parent=1 // pred_check_branch
      %437 = sbr.rel (0) target = $region49
    $region48: #{ppo_actor_forward.1} parent=1 // pred_region
      _
    $region49: #{ppo_actor_forward.1} parent=1 // pred_fallthru
      _
    // Predicated region
    $region50: #{ppo_actor_forward.1} parent=1 // pred_check
      _
    $region51: #{ppo_actor_forward.1} parent=1 // pred_check_branch
      %439 = sbr.rel (0) target = $region53
    $region52: #{ppo_actor_forward.1} parent=1 // pred_region
      %441 = vsyncadd [#allocation3], 0
      %s443 = sshll.u32 [#allocation2], 4
      %s444 = int_to_ptr.vmem [resolvable:$true] %s443
      %s445 = sshll.u32 %s12, 4
      %s446 = int_to_ptr.hbm [resolvable:$true] %s445
      %448 = dma.vmem_to_hbm [thread:$0]  %s444, 128, %s446, [#allocation3]
    $region53: #{ppo_actor_forward.1} parent=1 // pred_fallthru
      _
    // Predicated region
    $region54: #{ppo_actor_forward.1} parent=1 // pred_check
      _
    $region55: #{ppo_actor_forward.1} parent=1 // pred_check_branch
      %450 = sbr.rel (0) target = $region57
    $region56: #{ppo_actor_forward.1} parent=1 // pred_region
      _
    $region57: #{ppo_actor_forward.1} parent=1 // pred_fallthru
      _
    // Predicated region
    $region58: #{ppo_actor_forward.1} parent=1 // pred_check
      _
    $region59: #{ppo_actor_forward.1} parent=1 // pred_check_branch
      %452 = sbr.rel (0) target = $region61
    $region60: #{ppo_actor_forward.1} parent=1 // pred_region
      %454 = dma.done [#allocation3], 128
    $region61: #{ppo_actor_forward.1} parent=1 // pred_fallthru
      _
    %455 = vsyncpa [#allocation3], 1

</llo_original>
